<compile_context>
chip_gen: v5e
topology: v5e:2x2
jax: 0.10.0
libtpu: 0.0.40
codegen_flags: <defaults>
</compile_context>

<pallas_src>
import math

import numpy as np
import jax
import jax.numpy as jnp
from jax.experimental import pallas as pl
from jax.experimental.pallas import tpu as pltpu

# ---- module-consistent small shapes ----------------------------------------
BATCH = 2
SEQ = 8
HIDDEN = 32
NUM_HEADS = 4
HEAD_DIM = HIDDEN // NUM_HEADS
INTERMEDIATE = 64
LN_EPS = 1e-5

TOKENS = BATCH * SEQ              # flattened (batch, seq) token axis = 16
QKV = 3 * HIDDEN                  # fused q|k|v width = 96
HT = NUM_HEADS * TOKENS           # head-replicated key/value axis = 64
MASK_VALUE = -0.7 * float(np.finfo(np.float32).max)   # dtype-aware "-inf"

# ---- constant-slab layout (sublane row offsets, 128 lanes wide) -------------
LANES = 128
ROW_WQKV = 0                          # (HIDDEN, QKV)  [Wq*scale | Wk | Wv]
ROW_WROT = ROW_WQKV + HIDDEN          # (HIDDEN, QKV)  [Wq*scale | Wk | Wv] @ rot
ROW_COS = ROW_WROT + HIDDEN           # (TOKENS, QKV)  cos tiled (1 on V block)
ROW_SIN = ROW_COS + TOKENS            # (TOKENS, QKV)  sin tiled (0 on V block)
ROW_BIAS = ROW_SIN + TOKENS           # (TOKENS, HT)   causal+same-batch additive mask
ROW_BSUM = ROW_BIAS + TOKENS          # (HT, HT)       block-diag ones (per-head denom)
ROW_HSEL2 = ROW_BSUM + HT             # (HT, 2H)       head-selection mask for [k|v]
ROW_REP = ROW_HSEL2 + HT              # (HT, TOKENS)   sublane replication matrix
ROW_WO = ROW_REP + HT                 # (HIDDEN, HIDDEN)
ROW_W1 = ROW_WO + HIDDEN              # (HIDDEN, INTERMEDIATE)
ROW_W2 = ROW_W1 + HIDDEN              # (INTERMEDIATE, HIDDEN)
ROW_VEC = ROW_W2 + INTERMEDIATE       # 2 rows of packed vectors (ln params / biases)
SLAB_ROWS = ((ROW_VEC + 2 + 7) // 8) * 8   # pad sublane count to a multiple of 8


def _layer_norm(h, g, b):
    mu = jnp.mean(h, axis=-1, keepdims=True)
    var = jnp.mean((h - mu) * (h - mu), axis=-1, keepdims=True)
    return (h - mu) * jax.lax.rsqrt(var + LN_EPS) * g + b


# =============================================================================
# Kernel
# =============================================================================
def h2o_block_kernel(x_ref, c_ref, o_ref):
    x = x_ref[...]                                          # (TOKENS, HIDDEN)

    # ---- unpack the single constant slab (static slices -> free) ------------
    wqkv = c_ref[ROW_WQKV:ROW_WQKV + HIDDEN, 0:QKV]
    wrot = c_ref[ROW_WROT:ROW_WROT + HIDDEN, 0:QKV]
    cos3 = c_ref[ROW_COS:ROW_COS + TOKENS, 0:QKV]
    sin3 = c_ref[ROW_SIN:ROW_SIN + TOKENS, 0:QKV]
    bias = c_ref[ROW_BIAS:ROW_BIAS + TOKENS, 0:HT]
    bsum = c_ref[ROW_BSUM:ROW_BSUM + HT, 0:HT]
    hsel2 = c_ref[ROW_HSEL2:ROW_HSEL2 + HT, 0:2 * HIDDEN]
    rep = c_ref[ROW_REP:ROW_REP + HT, 0:TOKENS]
    wo = c_ref[ROW_WO:ROW_WO + HIDDEN, 0:HIDDEN]
    w1 = c_ref[ROW_W1:ROW_W1 + HIDDEN, 0:INTERMEDIATE]
    w2 = c_ref[ROW_W2:ROW_W2 + INTERMEDIATE, 0:HIDDEN]
    ln1_g = c_ref[ROW_VEC:ROW_VEC + 1, 0:HIDDEN]
    ln1_b = c_ref[ROW_VEC:ROW_VEC + 1, HIDDEN:2 * HIDDEN]
    ln2_g = c_ref[ROW_VEC:ROW_VEC + 1, 2 * HIDDEN:3 * HIDDEN]
    ln2_b = c_ref[ROW_VEC:ROW_VEC + 1, 3 * HIDDEN:4 * HIDDEN]
    b1 = c_ref[ROW_VEC + 1:ROW_VEC + 2, 0:INTERMEDIATE]
    b2 = c_ref[ROW_VEC + 1:ROW_VEC + 2, INTERMEDIATE:INTERMEDIATE + HIDDEN]

    # ---- layernorm1 + fused QKV projection with RoPE folded in --------------
    # Two INDEPENDENT matmuls (both only depend on h), no serialized qkv @ rot.
    h = _layer_norm(x, ln1_g, ln1_b)
    qkv_a = jnp.dot(h, wqkv, preferred_element_type=jnp.float32)   # (T, 3H)
    qkv_b = jnp.dot(h, wrot, preferred_element_type=jnp.float32)   # (T, 3H) = (h@Wqkv)@rot
    qkv = qkv_a * cos3 + qkv_b * sin3                              # RoPE on Q,K; V passthrough

    q = qkv[:, :HIDDEN]                                            # (TOKENS, HIDDEN), pre-scaled
    kv = qkv[:, HIDDEN:]                                           # (TOKENS, 2H) = [k | v]

    # ---- head-batched causal attention, all 2-D -----------------------------
    # Replicate K|V per head along sublanes with one constant matmul (idle MXU)
    # + one mask multiply; column u of the score matrix = head*TOKENS + key_tok.
    kv_rep = jnp.dot(rep, kv, preferred_element_type=jnp.float32) * hsel2   # (HT, 2H)
    k_rep = kv_rep[:, :HIDDEN]                                              # (HT, HIDDEN)
    v_rep = kv_rep[:, HIDDEN:]                                              # (HT, HIDDEN)

    scores = jnp.einsum('td,ud->tu', q, k_rep,
                        preferred_element_type=jnp.float32)        # (TOKENS, HT)
    scores = scores + bias                                          # causal + same-batch

    m = jnp.max(scores, axis=-1, keepdims=True)     # global row max >= every block max
    e = jnp.exp(scores - m)
    denom = jnp.dot(e, bsum, preferred_element_type=jnp.float32)    # per-head block sums
    p = e / denom                                                   # exact divide (accuracy)

    attn = jnp.dot(p, v_rep, preferred_element_type=jnp.float32)    # (T, H)
    attn = jnp.dot(attn, wo, preferred_element_type=jnp.float32)

    x1 = x + attn                                    # residual 1

    # ---- layernorm2 + feed-forward -------------------------------------------
    h2 = _layer_norm(x1, ln2_g, ln2_b)
    ff = jnp.dot(h2, w1, preferred_element_type=jnp.float32) + b1
    ff = jnp.maximum(ff, 0.0)
    ff = jnp.dot(ff, w2, preferred_element_type=jnp.float32) + b2

    o_ref[...] = x1 + ff                             # residual 2


# =============================================================================
# Host-side constant builders (numpy; run ONCE per weight set)
# =============================================================================
def _head_selection_mask():
    """(HT, HIDDEN) 0/1: row block h selects head h's channel block."""
    hsel = np.zeros((HT, HIDDEN), np.float32)
    for h in range(NUM_HEADS):
        hsel[h * TOKENS:(h + 1) * TOKENS, h * HEAD_DIM:(h + 1) * HEAD_DIM] = 1.0
    return hsel


def _attention_bias():
    """(TOKENS, HT) additive mask: 0 for same-batch causal pairs, -BIG else."""
    b = np.arange(TOKENS) // SEQ
    s = np.arange(TOKENS) % SEQ
    valid = (b[:, None] == b[None, :]) & (s[None, :] <= s[:, None])
    bias = np.where(valid, 0.0, MASK_VALUE).astype(np.float32)      # (T, T)
    return np.tile(bias, (1, NUM_HEADS))                            # (T, HT)


def _block_sum_matrix():
    """(HT, HT) block-diagonal ones: broadcasts per-head softmax denominators."""
    bs = np.zeros((HT, HT), np.float32)
    for h in range(NUM_HEADS):
        bs[h * TOKENS:(h + 1) * TOKENS, h * TOKENS:(h + 1) * TOKENS] = 1.0
    return bs


def _rope_rotation_matrix():
    """(QKV, QKV): qkv @ rot == rotate_half per head on the Q|K blocks, 0 on V."""
    rot = np.zeros((QKV, QKV), np.float32)
    half = HEAD_DIM // 2
    for blk in range(2 * NUM_HEADS):          # q heads, then k heads
        base = blk * HEAD_DIM
        for i in range(half):
            rot[base + half + i, base + i] = -1.0
            rot[base + i, base + half + i] = 1.0
    return rot


def build_const_slab(params):
    """Pack every constant into ONE sublane-stacked, 128-lane, zero-padded slab."""
    p = {k: np.asarray(v, np.float32) for k, v in params.items()}
    scale = 1.0 / math.sqrt(HEAD_DIM)

    # Fused QKV weight with the score scale folded into Q (exact: RoPE is linear),
    # and the rotate-half matrix folded into a second projection matrix.
    wqkv = np.concatenate([p["wq"] * scale, p["wk"], p["wv"]], axis=1)   # (H, 3H)
    wrot = wqkv @ _rope_rotation_matrix()                                # (H, 3H)

    cos = np.tile(p["cos"], (BATCH, NUM_HEADS))                          # (T, H)
    sin = np.tile(p["sin"], (BATCH, NUM_HEADS))
    cos3 = np.concatenate([cos, cos, np.ones((TOKENS, HIDDEN), np.float32)], axis=1)
    sin3 = np.concatenate([sin, sin, np.zeros((TOKENS, HIDDEN), np.float32)], axis=1)

    hsel = _head_selection_mask()
    hsel2 = np.concatenate([hsel, hsel], axis=1)                         # (HT, 2H)
    rep = np.tile(np.eye(TOKENS, dtype=np.float32), (NUM_HEADS, 1))      # (HT, T)

    slab = np.zeros((SLAB_ROWS, LANES), np.float32)
    slab[ROW_WQKV:ROW_WQKV + HIDDEN, :QKV] = wqkv
    slab[ROW_WROT:ROW_WROT + HIDDEN, :QKV] = wrot
    slab[ROW_COS:ROW_COS + TOKENS, :QKV] = cos3
    slab[ROW_SIN:ROW_SIN + TOKENS, :QKV] = sin3
    slab[ROW_BIAS:ROW_BIAS + TOKENS, :HT] = _attention_bias()
    slab[ROW_BSUM:ROW_BSUM + HT, :HT] = _block_sum_matrix()
    slab[ROW_HSEL2:ROW_HSEL2 + HT, :2 * HIDDEN] = hsel2
    slab[ROW_REP:ROW_REP + HT, :TOKENS] = rep
    slab[ROW_WO:ROW_WO + HIDDEN, :HIDDEN] = p["wo"]
    slab[ROW_W1:ROW_W1 + HIDDEN, :INTERMEDIATE] = p["w1"]
    slab[ROW_W2:ROW_W2 + INTERMEDIATE, :HIDDEN] = p["w2"]
    slab[ROW_VEC, 0:HIDDEN] = p["ln1_g"]
    slab[ROW_VEC, HIDDEN:2 * HIDDEN] = p["ln1_b"]
    slab[ROW_VEC, 2 * HIDDEN:3 * HIDDEN] = p["ln2_g"]
    slab[ROW_VEC, 3 * HIDDEN:4 * HIDDEN] = p["ln2_b"]
    slab[ROW_VEC + 1, 0:INTERMEDIATE] = p["b1"]
    slab[ROW_VEC + 1, INTERMEDIATE:INTERMEDIATE + HIDDEN] = p["b2"]
    return jnp.asarray(slab)


def make_h2o_block(params):
    """Build a jitted forward fn; constant packing happens once, here."""
    consts = build_const_slab(params)                 # hoisted out of per-call path

    vmem = pl.BlockSpec(memory_space=pltpu.MemorySpace.VMEM)
    call = pl.pallas_call(
        h2o_block_kernel,
        out_shape=jax.ShapeDtypeStruct((TOKENS, HIDDEN), jnp.float32),
        in_specs=[vmem, vmem],                        # 2 DMA descriptors: x + const slab
        out_specs=vmem,
        input_output_aliases={0: 0},                  # write result over the x buffer
    )

    @jax.jit
    def fwd(x):
        out2d = call(x.reshape(TOKENS, HIDDEN), consts)
        return out2d.reshape(BATCH, SEQ, HIDDEN)

    return fwd


# =============================================================================
# Pure-JAX reference (independent, per-head implementation of the same math)
# =============================================================================
def _rotate_half(x):
    half = x.shape[-1] // 2
    return jnp.concatenate([-x[:, half:], x[:, :half]], axis=-1)


def h2o_block_ref(x, params):
    hp = jax.lax.Precision.HIGHEST
    cos, sin = params["cos"], params["sin"]
    causal = jnp.arange(SEQ)[None, :] <= jnp.arange(SEQ)[:, None]

    def one(xb):
        h = _layer_norm(xb, params["ln1_g"], params["ln1_b"])
        q = jnp.dot(h, params["wq"], precision=hp)
        k = jnp.dot(h, params["wk"], precision=hp)
        v = jnp.dot(h, params["wv"], precision=hp)
        outs = []
        for hd in range(NUM_HEADS):
            sl = slice(hd * HEAD_DIM, (hd + 1) * HEAD_DIM)
            qh, kh, vh = q[:, sl], k[:, sl], v[:, sl]
            qh = qh * cos + _rotate_half(qh) * sin
            kh = kh * cos + _rotate_half(kh) * sin
            s = jnp.dot(qh, kh.T, precision=hp) / math.sqrt(HEAD_DIM)
            s = jnp.where(causal, s, -jnp.inf)
            p = jax.nn.softmax(s, axis=-1)
            outs.append(jnp.dot(p, vh, precision=hp))
        attn = jnp.dot(jnp.concatenate(outs, axis=-1), params["wo"], precision=hp)
        x1 = xb + attn
        h2 = _layer_norm(x1, params["ln2_g"], params["ln2_b"])
        ff = jnp.maximum(jnp.dot(h2, params["w1"], precision=hp) + params["b1"], 0.0)
        ff = jnp.dot(ff, params["w2"], precision=hp) + params["b2"]
        return x1 + ff

    return jax.vmap(one)(x)


def make_params(key):
    ks = jax.random.split(key, 12)
    std = 0.05
    n = lambda k, shape: std * jax.random.normal(k, shape, jnp.float32)
    p = {
        "ln1_g": 1.0 + n(ks[0], (HIDDEN,)),
        "ln1_b": n(ks[1], (HIDDEN,)),
        "ln2_g": 1.0 + n(ks[2], (HIDDEN,)),
        "ln2_b": n(ks[3], (HIDDEN,)),
        # Llama-style attention projections, stored (in, out); no bias
        "wq": n(ks[4], (HIDDEN, HIDDEN)),
        "wk": n(ks[5], (HIDDEN, HIDDEN)),
        "wv": n(ks[6], (HIDDEN, HIDDEN)),
        "wo": n(ks[7], (HIDDEN, HIDDEN)),
        # feed-forward nn.Linear weights stored (in, out), with biases
        "w1": n(ks[8], (HIDDEN, INTERMEDIATE)),
        "b1": n(ks[9], (INTERMEDIATE,)),
        "w2": n(ks[10], (INTERMEDIATE, HIDDEN)),
        "b2": n(ks[11], (HIDDEN,)),
    }
    # RoPE tables, (SEQ, HEAD_DIM)
    inv_freq = 1.0 / (10000.0 ** (np.arange(0, HEAD_DIM, 2, dtype=np.float32)
                                  / HEAD_DIM))
    freqs = np.outer(np.arange(SEQ, dtype=np.float32), inv_freq)
    emb = np.concatenate([freqs, freqs], axis=-1)
    p["cos"] = jnp.asarray(np.cos(emb), jnp.float32)
    p["sin"] = jnp.asarray(np.sin(emb), jnp.float32)
    return p


if __name__ == "__main__":
    key = jax.random.PRNGKey(0)
    kx, kp = jax.random.split(key)
    x = jax.random.normal(kx, (BATCH, SEQ, HIDDEN), jnp.float32)
    params = make_params(kp)

    fwd = make_h2o_block(params)          # constants packed once, wrapper jitted
    out = jax.block_until_ready(fwd(x))
    ref = h2o_block_ref(x, params)

    assert out.shape == (BATCH, SEQ, HIDDEN)
    # tolerance covers MXU f32 matmul rounding vs. the HIGHEST-precision reference
    assert jnp.allclose(out, ref, atol=2e-3, rtol=2e-3), "mismatch vs reference"
    print("KERNEL_OK")
</pallas_src>

<mosaic_0001>
module attributes {stable_mosaic.version = 11 : i64} {
  func.func @h2o_block_kernel(%arg0: memref<16x32xf32, #tpu.memory_space<vmem>>, %arg1: memref<440x128xf32, #tpu.memory_space<vmem>>, %arg2: memref<16x32xf32, #tpu.memory_space<vmem>>) attributes {dimension_semantics = [], scalar_prefetch = 0 : i64, scratch_operands = 0 : i64, tpu.core_type = #tpu.core_type<tc>} {
    %c0 = arith.constant 0 : index
    %c0_0 = arith.constant 0 : index
    %0 = vector.load %arg0[%c0, %c0_0] : memref<16x32xf32, #tpu.memory_space<vmem>>, vector<16x32xf32>
    %c0_1 = arith.constant 0 : index
    %c0_2 = arith.constant 0 : index
    %1 = vector.load %arg1[%c0_1, %c0_2] : memref<440x128xf32, #tpu.memory_space<vmem>>, vector<32x96xf32>
    %c32 = arith.constant 32 : index
    %c0_3 = arith.constant 0 : index
    %2 = vector.load %arg1[%c32, %c0_3] : memref<440x128xf32, #tpu.memory_space<vmem>>, vector<32x96xf32>
    %c64 = arith.constant 64 : index
    %c0_4 = arith.constant 0 : index
    %3 = vector.load %arg1[%c64, %c0_4] : memref<440x128xf32, #tpu.memory_space<vmem>>, vector<16x96xf32>
    %c80 = arith.constant 80 : index
    %c0_5 = arith.constant 0 : index
    %4 = vector.load %arg1[%c80, %c0_5] : memref<440x128xf32, #tpu.memory_space<vmem>>, vector<16x96xf32>
    %c96 = arith.constant 96 : index
    %c0_6 = arith.constant 0 : index
    %5 = vector.load %arg1[%c96, %c0_6] : memref<440x128xf32, #tpu.memory_space<vmem>>, vector<16x64xf32>
    %c112 = arith.constant 112 : index
    %c0_7 = arith.constant 0 : index
    %6 = vector.load %arg1[%c112, %c0_7] : memref<440x128xf32, #tpu.memory_space<vmem>>, vector<64x64xf32>
    %c176 = arith.constant 176 : index
    %c0_8 = arith.constant 0 : index
    %7 = vector.load %arg1[%c176, %c0_8] : memref<440x128xf32, #tpu.memory_space<vmem>>, vector<64x64xf32>
    %c240 = arith.constant 240 : index
    %c0_9 = arith.constant 0 : index
    %8 = vector.load %arg1[%c240, %c0_9] : memref<440x128xf32, #tpu.memory_space<vmem>>, vector<64x16xf32>
    %c304 = arith.constant 304 : index
    %c0_10 = arith.constant 0 : index
    %9 = vector.load %arg1[%c304, %c0_10] : memref<440x128xf32, #tpu.memory_space<vmem>>, vector<32x32xf32>
    %c336 = arith.constant 336 : index
    %c0_11 = arith.constant 0 : index
    %10 = vector.load %arg1[%c336, %c0_11] : memref<440x128xf32, #tpu.memory_space<vmem>>, vector<32x64xf32>
    %c368 = arith.constant 368 : index
    %c0_12 = arith.constant 0 : index
    %11 = vector.load %arg1[%c368, %c0_12] : memref<440x128xf32, #tpu.memory_space<vmem>>, vector<64x32xf32>
    %c432 = arith.constant 432 : index
    %c0_13 = arith.constant 0 : index
    %12 = vector.load %arg1[%c432, %c0_13] : memref<440x128xf32, #tpu.memory_space<vmem>>, vector<1x32xf32>
    %c432_14 = arith.constant 432 : index
    %c32_15 = arith.constant 32 : index
    %13 = vector.load %arg1[%c432_14, %c32_15] : memref<440x128xf32, #tpu.memory_space<vmem>>, vector<1x32xf32>
    %c432_16 = arith.constant 432 : index
    %c64_17 = arith.constant 64 : index
    %14 = vector.load %arg1[%c432_16, %c64_17] : memref<440x128xf32, #tpu.memory_space<vmem>>, vector<1x32xf32>
    %c432_18 = arith.constant 432 : index
    %c96_19 = arith.constant 96 : index
    %15 = vector.load %arg1[%c432_18, %c96_19] : memref<440x128xf32, #tpu.memory_space<vmem>>, vector<1x32xf32>
    %c433 = arith.constant 433 : index
    %c0_20 = arith.constant 0 : index
    %16 = vector.load %arg1[%c433, %c0_20] : memref<440x128xf32, #tpu.memory_space<vmem>>, vector<1x64xf32>
    %c433_21 = arith.constant 433 : index
    %c64_22 = arith.constant 64 : index
    %17 = vector.load %arg1[%c433_21, %c64_22] : memref<440x128xf32, #tpu.memory_space<vmem>>, vector<1x32xf32>
    %cst = arith.constant dense<0.000000e+00> : vector<16xf32>
    %18 = vector.multi_reduction <add>, %0, %cst [1] : vector<16x32xf32> to vector<16xf32>
    %19 = vector.shape_cast %18 : vector<16xf32> to vector<16x1xf32>
    %cst_23 = arith.constant 3.200000e+01 : f32
    %20 = vector.broadcast %cst_23 : f32 to vector<16x1xf32>
    %21 = arith.divf %19, %20 : vector<16x1xf32>
    %22 = vector.broadcast %21 : vector<16x1xf32> to vector<16x32xf32>
    %23 = arith.subf %0, %22 : vector<16x32xf32>
    %24 = vector.broadcast %21 : vector<16x1xf32> to vector<16x32xf32>
    %25 = arith.subf %0, %24 : vector<16x32xf32>
    %26 = arith.mulf %23, %25 : vector<16x32xf32>
    %cst_24 = arith.constant dense<0.000000e+00> : vector<16xf32>
    %27 = vector.multi_reduction <add>, %26, %cst_24 [1] : vector<16x32xf32> to vector<16xf32>
    %28 = vector.shape_cast %27 : vector<16xf32> to vector<16x1xf32>
    %cst_25 = arith.constant 3.200000e+01 : f32
    %29 = vector.broadcast %cst_25 : f32 to vector<16x1xf32>
    %30 = arith.divf %28, %29 : vector<16x1xf32>
    %31 = vector.broadcast %21 : vector<16x1xf32> to vector<16x32xf32>
    %32 = arith.subf %0, %31 : vector<16x32xf32>
    %cst_26 = arith.constant 9.99999974E-6 : f32
    %33 = vector.broadcast %cst_26 : f32 to vector<16x1xf32>
    %34 = arith.addf %30, %33 : vector<16x1xf32>
    %35 = math.rsqrt %34 : vector<16x1xf32>
    %36 = vector.broadcast %35 : vector<16x1xf32> to vector<16x32xf32>
    %37 = arith.mulf %32, %36 : vector<16x32xf32>
    %38 = vector.broadcast %12 : vector<1x32xf32> to vector<16x32xf32>
    %39 = arith.mulf %37, %38 : vector<16x32xf32>
    %40 = vector.broadcast %13 : vector<1x32xf32> to vector<16x32xf32>
    %41 = arith.addf %39, %40 : vector<16x32xf32>
    %cst_27 = arith.constant dense<0.000000e+00> : vector<16x96xf32>
    %42 = tpu.matmul %41, %1, %cst_27 {dimension_numbers = #tpu.dot_dimension_numbers<[1], [0], [0], [1], [0, 0, 1, 1], [], []>} : vector<16x32xf32>, vector<32x96xf32>, vector<16x96xf32> -> vector<16x96xf32>
    %cst_28 = arith.constant dense<0.000000e+00> : vector<16x96xf32>
    %43 = tpu.matmul %41, %2, %cst_28 {dimension_numbers = #tpu.dot_dimension_numbers<[1], [0], [0], [1], [0, 0, 1, 1], [], []>} : vector<16x32xf32>, vector<32x96xf32>, vector<16x96xf32> -> vector<16x96xf32>
    %44 = arith.mulf %42, %3 : vector<16x96xf32>
    %45 = arith.mulf %43, %4 : vector<16x96xf32>
    %46 = arith.addf %44, %45 : vector<16x96xf32>
    %47 = vector.extract_strided_slice %46 {offsets = [0, 0], sizes = [16, 32], strides = [1, 1]} : vector<16x96xf32> to vector<16x32xf32>
    %48 = vector.extract_strided_slice %46 {offsets = [0, 32], sizes = [16, 64], strides = [1, 1]} : vector<16x96xf32> to vector<16x64xf32>
    %cst_29 = arith.constant dense<0.000000e+00> : vector<64x64xf32>
    %49 = tpu.matmul %8, %48, %cst_29 {dimension_numbers = #tpu.dot_dimension_numbers<[1], [0], [0], [1], [0, 0, 1, 1], [], []>} : vector<64x16xf32>, vector<16x64xf32>, vector<64x64xf32> -> vector<64x64xf32>
    %50 = arith.mulf %49, %7 : vector<64x64xf32>
    %51 = vector.extract_strided_slice %50 {offsets = [0, 0], sizes = [64, 32], strides = [1, 1]} : vector<64x64xf32> to vector<64x32xf32>
    %52 = vector.extract_strided_slice %50 {offsets = [0, 32], sizes = [64, 32], strides = [1, 1]} : vector<64x64xf32> to vector<64x32xf32>
    "tpu.trace_start"() <{level = 10 : i32, message = "td,ud->tu"}> : () -> ()
    %cst_30 = arith.constant dense<0.000000e+00> : vector<16x64xf32>
    %53 = tpu.matmul %47, %51, %cst_30 {dimension_numbers = #tpu.dot_dimension_numbers<[1], [1], [0], [0], [0, 0, 1, 0], [], []>} : vector<16x32xf32>, vector<64x32xf32>, vector<16x64xf32> -> vector<16x64xf32>
    "tpu.trace_stop"() : () -> ()
    %54 = arith.addf %53, %5 : vector<16x64xf32>
    %cst_31 = arith.constant dense<0xFF800000> : vector<16xf32>
    %55 = vector.multi_reduction <maximumf>, %54, %cst_31 [1] : vector<16x64xf32> to vector<16xf32>
    %56 = vector.shape_cast %55 : vector<16xf32> to vector<16x1xf32>
    %57 = vector.broadcast %56 : vector<16x1xf32> to vector<16x64xf32>
    %58 = arith.subf %54, %57 : vector<16x64xf32>
    %59 = math.exp %58 : vector<16x64xf32>
    %cst_32 = arith.constant dense<0.000000e+00> : vector<16x64xf32>
    %60 = tpu.matmul %59, %6, %cst_32 {dimension_numbers = #tpu.dot_dimension_numbers<[1], [0], [0], [1], [0, 0, 1, 1], [], []>} : vector<16x64xf32>, vector<64x64xf32>, vector<16x64xf32> -> vector<16x64xf32>
    %61 = arith.divf %59, %60 : vector<16x64xf32>
    %cst_33 = arith.constant dense<0.000000e+00> : vector<16x32xf32>
    %62 = tpu.matmul %61, %52, %cst_33 {dimension_numbers = #tpu.dot_dimension_numbers<[1], [0], [0], [1], [0, 0, 1, 1], [], []>} : vector<16x64xf32>, vector<64x32xf32>, vector<16x32xf32> -> vector<16x32xf32>
    %cst_34 = arith.constant dense<0.000000e+00> : vector<16x32xf32>
    %63 = tpu.matmul %62, %9, %cst_34 {dimension_numbers = #tpu.dot_dimension_numbers<[1], [0], [0], [1], [0, 0, 1, 1], [], []>} : vector<16x32xf32>, vector<32x32xf32>, vector<16x32xf32> -> vector<16x32xf32>
    %64 = arith.addf %0, %63 : vector<16x32xf32>
    %cst_35 = arith.constant dense<0.000000e+00> : vector<16xf32>
    %65 = vector.multi_reduction <add>, %64, %cst_35 [1] : vector<16x32xf32> to vector<16xf32>
    %66 = vector.shape_cast %65 : vector<16xf32> to vector<16x1xf32>
    %cst_36 = arith.constant 3.200000e+01 : f32
    %67 = vector.broadcast %cst_36 : f32 to vector<16x1xf32>
    %68 = arith.divf %66, %67 : vector<16x1xf32>
    %69 = vector.broadcast %68 : vector<16x1xf32> to vector<16x32xf32>
    %70 = arith.subf %64, %69 : vector<16x32xf32>
    %71 = vector.broadcast %68 : vector<16x1xf32> to vector<16x32xf32>
    %72 = arith.subf %64, %71 : vector<16x32xf32>
    %73 = arith.mulf %70, %72 : vector<16x32xf32>
    %cst_37 = arith.constant dense<0.000000e+00> : vector<16xf32>
    %74 = vector.multi_reduction <add>, %73, %cst_37 [1] : vector<16x32xf32> to vector<16xf32>
    %75 = vector.shape_cast %74 : vector<16xf32> to vector<16x1xf32>
    %cst_38 = arith.constant 3.200000e+01 : f32
    %76 = vector.broadcast %cst_38 : f32 to vector<16x1xf32>
    %77 = arith.divf %75, %76 : vector<16x1xf32>
    %78 = vector.broadcast %68 : vector<16x1xf32> to vector<16x32xf32>
    %79 = arith.subf %64, %78 : vector<16x32xf32>
    %cst_39 = arith.constant 9.99999974E-6 : f32
    %80 = vector.broadcast %cst_39 : f32 to vector<16x1xf32>
    %81 = arith.addf %77, %80 : vector<16x1xf32>
    %82 = math.rsqrt %81 : vector<16x1xf32>
    %83 = vector.broadcast %82 : vector<16x1xf32> to vector<16x32xf32>
    %84 = arith.mulf %79, %83 : vector<16x32xf32>
    %85 = vector.broadcast %14 : vector<1x32xf32> to vector<16x32xf32>
    %86 = arith.mulf %84, %85 : vector<16x32xf32>
    %87 = vector.broadcast %15 : vector<1x32xf32> to vector<16x32xf32>
    %88 = arith.addf %86, %87 : vector<16x32xf32>
    %cst_40 = arith.constant dense<0.000000e+00> : vector<16x64xf32>
    %89 = tpu.matmul %88, %10, %cst_40 {dimension_numbers = #tpu.dot_dimension_numbers<[1], [0], [0], [1], [0, 0, 1, 1], [], []>} : vector<16x32xf32>, vector<32x64xf32>, vector<16x64xf32> -> vector<16x64xf32>
    %90 = vector.broadcast %16 : vector<1x64xf32> to vector<16x64xf32>
    %91 = arith.addf %89, %90 : vector<16x64xf32>
    %cst_41 = arith.constant 0.000000e+00 : f32
    %92 = vector.broadcast %cst_41 : f32 to vector<16x64xf32>
    %93 = arith.maximumf %91, %92 : vector<16x64xf32>
    %cst_42 = arith.constant dense<0.000000e+00> : vector<16x32xf32>
    %94 = tpu.matmul %93, %11, %cst_42 {dimension_numbers = #tpu.dot_dimension_numbers<[1], [0], [0], [1], [0, 0, 1, 1], [], []>} : vector<16x64xf32>, vector<64x32xf32>, vector<16x32xf32> -> vector<16x32xf32>
    %95 = vector.broadcast %17 : vector<1x32xf32> to vector<16x32xf32>
    %96 = arith.addf %94, %95 : vector<16x32xf32>
    %97 = arith.addf %64, %96 : vector<16x32xf32>
    %c0_43 = arith.constant 0 : index
    %c0_44 = arith.constant 0 : index
    %98 = vector.load %arg2[%c0_43, %c0_44] : memref<16x32xf32, #tpu.memory_space<vmem>>, vector<16x32xf32>
    tpu.vector_store %arg2[%c0_43, %c0_44], %97 {strides = array<i32>} : memref<16x32xf32, #tpu.memory_space<vmem>>, vector<16x32xf32>,
    return
  }
}

</mosaic_0001>

<llo_original>
// kernel: fwd.1
$region0: #{fwd.1}
  #allocation0 [shape = 'u32[]', space=smem, size = 0x4, offset = 0x4, fixed_abs, tag = 'smem constant byte address 0x4 - core index']
  #allocation1 [shape = 'u32[72,128]{1,0:T(1,128)}', space=vmem, size = 0x9000, scoped, tag = 'internal scratch']
  %s0 = inlined_call_operand.vmem [shape: f32[16,32], index: 0, kind: input, shape index: {}, may-alias: {0,2}]
  %s1 = inlined_call_operand.hbm [shape: f32[440,128], index: 1, kind: input, shape index: {}]
  %s2 = inlined_call_operand.vmem [shape: f32[16,32], index: 2, kind: output, shape index: {}, may-alias: {0,2}]
  %s3 = sld [smem:[#allocation0]]
  $region22: #{fwd.1} parent=0
    _
  %s5 = ssub.s32 1, %s3
  %s6 = scalar_select 0, %s5, %s3
  $region1: #{fwd.1} parent=0
    #allocation2 [shape = 'u8[225280]{0}', space=vmem, size = 0x37000, scoped, tag = 'input window, operand 1, single buffered']
    #allocation3 [shape = 's32[1]{0}', space=sflag, size = 0x4, scoped, tag = 'scoped memory for fwd.1']
    %7 = vsyncpa [#allocation3], 0
    // Predicated region
    $region2: #{fwd.1} parent=1 // pred_check
      _
    $region3: #{fwd.1} parent=1 // pred_check_branch
      %9 = sbr.rel (0) target = $region5
    $region4: #{fwd.1} parent=1 // pred_region
      _
    $region5: #{fwd.1} parent=1 // pred_fallthru
      _
    // Predicated region
    $region6: #{fwd.1} parent=1 // pred_check
      _
    $region7: #{fwd.1} parent=1 // pred_check_branch
      %11 = sbr.rel (0) target = $region9
    $region8: #{fwd.1} parent=1 // pred_region
      %13 = vsyncadd [#allocation3], 0
      %s14 = sshll.u32 %s1, 4
      %s15 = int_to_ptr.hbm [resolvable:$true] %s14
      %s16 = sshll.u32 [#allocation2], 4
      %s17 = int_to_ptr.vmem [resolvable:$true] %s16
      %22 = dma.hbm_to_vmem [thread:$0]  %s15, 7040, %s17, [#allocation3], 128, 128, 8
    $region9: #{fwd.1} parent=1 // pred_fallthru
      _
    // Predicated region
    $region10: #{fwd.1} parent=1 // pred_check
      _
    $region11: #{fwd.1} parent=1 // pred_check_branch
      %24 = sbr.rel (0) target = $region13
    $region12: #{fwd.1} parent=1 // pred_region
      %26 = dma.done [#allocation3], 7040
    $region13: #{fwd.1} parent=1 // pred_fallthru
      _
    %v27 = vld [vmem:[%s0] sm:$0xff]
    %v28 = vld [vmem:[%s0 + $0x8] sm:$0xff]
    %v29 = vld [vmem:[#allocation2] sm:$0xff]
    %v30 = vld [vmem:[#allocation2 + $0x8] sm:$0xff]
    %v31 = vld [vmem:[#allocation2 + $0x10] sm:$0xff]
    %v32 = vld [vmem:[#allocation2 + $0x18] sm:$0xff]
    %v33 = vld [vmem:[#allocation2 + $0x20] sm:$0xff]
    %v34 = vld [vmem:[#allocation2 + $0x28] sm:$0xff]
    %v35 = vld [vmem:[#allocation2 + $0x30] sm:$0xff]
    %v36 = vld [vmem:[#allocation2 + $0x38] sm:$0xff]
    %v37 = vld [vmem:[#allocation2 + $0x40] sm:$0xff]
    %v38 = vld [vmem:[#allocation2 + $0x48] sm:$0xff]
    %v39 = vld [vmem:[#allocation2 + $0x50] sm:$0xff]
    %v40 = vld [vmem:[#allocation2 + $0x58] sm:$0xff]
    %v41 = vld [vmem:[#allocation2 + $0x60] sm:$0xff]
    %v42 = vld [vmem:[#allocation2 + $0x68] sm:$0xff]
    %v43 = vld [vmem:[#allocation2 + $0x70] sm:$0xff]
    %v44 = vld [vmem:[#allocation2 + $0x78] sm:$0xff]
    %v45 = vld [vmem:[#allocation2 + $0x80] sm:$0xff]
    %v46 = vld [vmem:[#allocation2 + $0x88] sm:$0xff]
    %v47 = vld [vmem:[#allocation2 + $0x90] sm:$0xff]
    %v48 = vld [vmem:[#allocation2 + $0x98] sm:$0xff]
    %v49 = vld [vmem:[#allocation2 + $0xa0] sm:$0xff]
    %v50 = vld [vmem:[#allocation2 + $0xa8] sm:$0xff]
    %v51 = vld [vmem:[#allocation2 + $0xb0] sm:$0xff]
    %v52 = vld [vmem:[#allocation2 + $0xb8] sm:$0xff]
    %v53 = vld [vmem:[#allocation2 + $0xc0] sm:$0xff]
    %v54 = vld [vmem:[#allocation2 + $0xc8] sm:$0xff]
    %v55 = vld [vmem:[#allocation2 + $0xd0] sm:$0xff]
    %v56 = vld [vmem:[#allocation2 + $0xd8] sm:$0xff]
    %v57 = vld [vmem:[#allocation2 + $0xe0] sm:$0xff]
    %v58 = vld [vmem:[#allocation2 + $0xe8] sm:$0xff]
    %v59 = vld [vmem:[#allocation2 + $0xf0] sm:$0xff]
    %v60 = vld [vmem:[#allocation2 + $0xf8] sm:$0xff]
    %v61 = vld [vmem:[#allocation2 + $0x100] sm:$0xff]
    %v62 = vld [vmem:[#allocation2 + $0x108] sm:$0xff]
    %v63 = vld [vmem:[#allocation2 + $0x110] sm:$0xff]
    %v64 = vld [vmem:[#allocation2 + $0x118] sm:$0xff]
    %v65 = vld [vmem:[#allocation2 + $0x120] sm:$0xff]
    %v66 = vld [vmem:[#allocation2 + $0x128] sm:$0xff]
    %v67 = vld [vmem:[#allocation2 + $0x130] sm:$0xff]
    %v68 = vld [vmem:[#allocation2 + $0x138] sm:$0xff]
    %v69 = vld [vmem:[#allocation2 + $0x140] sm:$0xff]
    %v70 = vld [vmem:[#allocation2 + $0x148] sm:$0xff]
    %v71 = vld [vmem:[#allocation2 + $0x150] sm:$0xff]
    %v72 = vld [vmem:[#allocation2 + $0x158] sm:$0xff]
    %v73 = vld [vmem:[#allocation2 + $0x160] sm:$0xff]
    %v74 = vld [vmem:[#allocation2 + $0x168] sm:$0xff]
    %v75 = vld [vmem:[#allocation2 + $0x170] sm:$0xff]
    %v76 = vld [vmem:[#allocation2 + $0x178] sm:$0xff]
    %v77 = vld [vmem:[#allocation2 + $0x180] sm:$0xff]
    %v78 = vld [vmem:[#allocation2 + $0x188] sm:$0xff]
    %v79 = vld [vmem:[#allocation2 + $0x190] sm:$0xff]
    %v80 = vld [vmem:[#allocation2 + $0x198] sm:$0xff]
    %v81 = vld [vmem:[#allocation2 + $0x1a0] sm:$0xff]
    %v82 = vld [vmem:[#allocation2 + $0x1a8] sm:$0xff]
    %v83 = vld [vmem:[#allocation2 + $0x1b0] sm:$0x1]
    %v84 = vld [vmem:[#allocation2 + $0x1b1] sm:$0x1]
    %vm85 = vcmask 261120
    %v86 = vsel %vm85, %v27, 0.0
    %87 = vadd.xlane.f32.xlu0 %v86
    %v88 = vpop.xlane.xlu0 %87
    %v89 = vsel %vm85, %v28, 0.0
    %90 = vadd.xlane.f32.xlu0 %v89
    %v91 = vpop.xlane.xlu0 %90
    %v92 = vrcp.pop 32.0
    %v93 = vmul.f32 32.0, %v92
    %v94 = vsub.f32 1.0, %v93
    %v95 = vmul.f32 %v92, %v94
    %v96 = vadd.f32 %v92, %v95
    %vm97 = vweird.f32 %v92
    %v98 = vsel %vm97, %v92, %v96
    %v99 = vmul.f32 %v88, %v98
    %v100 = vmul.f32 %v91, %v98
    %v101 = vsub.f32 %v27, %v99
    %v102 = vsub.f32 %v28, %v100
    %v103 = vmul.f32 %v101, %v101
    %v104 = vmul.f32 %v102, %v102
    %v105 = vsel %vm85, %v103, 0.0
    %106 = vadd.xlane.f32.xlu0 %v105
    %v107 = vpop.xlane.xlu0 %106
    %v108 = vsel %vm85, %v104, 0.0
    %109 = vadd.xlane.f32.xlu0 %v108
    %v110 = vpop.xlane.xlu0 %109
    %v111 = vmul.f32 %v107, %v98
    %v112 = vmul.f32 %v110, %v98
    %v113 = vadd.f32 %v111, 1e-05
    %v114 = vadd.f32 %v112, 1e-05
    %v115 = vrsqrt.pop %v113
    %v116 = vmul.f32 %v115, %v113
    %v117 = vmul.f32 %v116, %v115
    %v118 = vmul.f32 0.5, %v117
    %v119 = vsub.f32 1.5, %v118
    %v120 = vmul.f32 %v115, %v119
    %vm121 = vweird.f32 %v113
    %vm122 = vweird.f32 %v115
    %vm123 = vmor %vm121, %vm122
    %v124 = vsel %vm123, %v115, %v120
    %v125 = vrsqrt.pop %v114
    %v126 = vmul.f32 %v125, %v114
    %v127 = vmul.f32 %v126, %v125
    %v128 = vmul.f32 0.5, %v127
    %v129 = vsub.f32 1.5, %v128
    %v130 = vmul.f32 %v125, %v129
    %vm131 = vweird.f32 %v114
    %vm132 = vweird.f32 %v125
    %vm133 = vmor %vm131, %vm132
    %v134 = vsel %vm133, %v125, %v130
    %v135 = vmul.f32 %v101, %v124
    %v136 = vmul.f32 %v102, %v134
    %v137 = vperm.slane %v83, 0
    %v138 = vmul.f32 %v135, %v137
    %v139 = vmul.f32 %v136, %v137
    %141 = vrot.lane.b32.xlu0 %v137, 96
    %v142 = vpop.permute.xlu0 %141
    %v144 = vadd.f32 %v138, %v142
    %v145 = vadd.f32 %v139, %v142
    %v147 = vsel %vm85, %v144, 0
    %v150 = vsel %vm85, %v145, 0
    %152 = vmatpush.msra.mxu0 0.0
    %153 = vmatpush.msra.mxu0 0.0
    %154 = vmatpush.msra.mxu0 0.0
    %155 = vmatpush.msra.mxu0 0.0
    %156 = vmatpush.msra.mxu0 0.0
    %157 = vmatpush.msra.mxu0 0.0
    %158 = vmatpush.msra.mxu0 0.0
    %159 = vmatpush.msra.mxu0 0.0
    %160 = vmatpush.msra.mxu0 0.0
    %161 = vmatpush.msra.mxu0 0.0
    %162 = vmatpush.msra.mxu0 0.0
    %163 = vmatpush.msra.mxu0 0.0
    %164 = vmatpush.msra.mxu0 %v32
    %165 = vmatpush.msra.mxu0 %v31
    %166 = vmatpush.msra.mxu0 %v30
    %167 = vmatpush.msra.mxu0 %v29
    %168 = vmatmul.f32.gmra.mxu0 %v147
    %v169 = vpop.f32.mrf.mxu0
    %v170 = vadd.f32 0.0, %v169
    %171 = vmatmul.f32.gmra.mxu0 %v150
    %v172 = vpop.f32.mrf.mxu0
    %v173 = vadd.f32 0.0, %v172
    %174 = vdwg.mxu0
    %175 = vmatpush.msra.mxu0 0.0
    %176 = vmatpush.msra.mxu0 0.0
    %177 = vmatpush.msra.mxu0 0.0
    %178 = vmatpush.msra.mxu0 0.0
    %179 = vmatpush.msra.mxu0 0.0
    %180 = vmatpush.msra.mxu0 0.0
    %181 = vmatpush.msra.mxu0 0.0
    %182 = vmatpush.msra.mxu0 0.0
    %183 = vmatpush.msra.mxu0 0.0
    %184 = vmatpush.msra.mxu0 0.0
    %185 = vmatpush.msra.mxu0 0.0
    %186 = vmatpush.msra.mxu0 0.0
    %187 = vmatpush.msra.mxu0 %v36
    %188 = vmatpush.msra.mxu0 %v35
    %189 = vmatpush.msra.mxu0 %v34
    %190 = vmatpush.msra.mxu0 %v33
    %191 = vmatmul.f32.gmra.mxu0 %v147
    %v192 = vpop.f32.mrf.mxu0
    %v193 = vadd.f32 0.0, %v192
    %194 = vmatmul.f32.gmra.mxu0 %v150
    %v195 = vpop.f32.mrf.mxu0
    %v196 = vadd.f32 0.0, %v195
    %197 = vdwg.mxu0
    %v198 = vmul.f32 %v170, %v37
    %v199 = vmul.f32 %v173, %v38
    %v200 = vmul.f32 %v193, %v39
    %v201 = vmul.f32 %v196, %v40
    %v202 = vadd.f32 %v198, %v200
    %v203 = vadd.f32 %v199, %v201
    %206 = vrot.lane.b32.xlu0 %v202, 96
    %v207 = vpop.permute.xlu0 %206
    %208 = vrot.lane.b32.xlu0 %v203, 96
    %v209 = vpop.permute.xlu0 %208
    %vm212 = vcmask 130048
    %v214 = vsel %vm212, %v59, 0
    %v217 = vsel %vm212, %v60, 0
    %v220 = vsel %vm212, %v61, 0
    %v223 = vsel %vm212, %v62, 0
    %v226 = vsel %vm212, %v63, 0
    %v229 = vsel %vm212, %v64, 0
    %v232 = vsel %vm212, %v65, 0
    %v235 = vsel %vm212, %v66, 0
    %237 = vmatpush.msra.mxu0 0.0
    %238 = vmatpush.msra.mxu0 0.0
    %239 = vmatpush.msra.mxu0 0.0
    %240 = vmatpush.msra.mxu0 0.0
    %241 = vmatpush.msra.mxu0 0.0
    %242 = vmatpush.msra.mxu0 0.0
    %243 = vmatpush.msra.mxu0 0.0
    %244 = vmatpush.msra.mxu0 0.0
    %245 = vmatpush.msra.mxu0 0.0
    %246 = vmatpush.msra.mxu0 0.0
    %247 = vmatpush.msra.mxu0 0.0
    %248 = vmatpush.msra.mxu0 0.0
    %249 = vmatpush.msra.mxu0 0.0
    %250 = vmatpush.msra.mxu0 0.0
    %251 = vmatpush.msra.mxu0 %v209
    %252 = vmatpush.msra.mxu0 %v207
    %253 = vmatmul.f32.gmra.mxu0 %v214
    %v254 = vpop.f32.mrf.mxu0
    %v255 = vadd.f32 0.0, %v254
    %256 = vmatmul.f32.gmra.mxu0 %v217
    %v257 = vpop.f32.mrf.mxu0
    %v258 = vadd.f32 0.0, %v257
    %259 = vmatmul.f32.gmra.mxu0 %v220
    %v260 = vpop.f32.mrf.mxu0
    %v261 = vadd.f32 0.0, %v260
    %262 = vmatmul.f32.gmra.mxu0 %v223
    %v263 = vpop.f32.mrf.mxu0
    %v264 = vadd.f32 0.0, %v263
    %265 = vmatmul.f32.gmra.mxu0 %v226
    %v266 = vpop.f32.mrf.mxu0
    %v267 = vadd.f32 0.0, %v266
    %268 = vmatmul.f32.gmra.mxu0 %v229
    %v269 = vpop.f32.mrf.mxu0
    %v270 = vadd.f32 0.0, %v269
    %271 = vmatmul.f32.gmra.mxu0 %v232
    %v272 = vpop.f32.mrf.mxu0
    %v273 = vadd.f32 0.0, %v272
    %274 = vmatmul.f32.gmra.mxu0 %v235
    %v275 = vpop.f32.mrf.mxu0
    %v276 = vadd.f32 0.0, %v275
    %277 = vdwg.mxu0
    %v278 = vmul.f32 %v255, %v51
    %v279 = vmul.f32 %v258, %v52
    %v280 = vmul.f32 %v261, %v53
    %v281 = vmul.f32 %v264, %v54
    %v282 = vmul.f32 %v267, %v55
    %v283 = vmul.f32 %v270, %v56
    %v284 = vmul.f32 %v273, %v57
    %v285 = vmul.f32 %v276, %v58
    %v286 = vsel %vm85, %v202, 0
    %v288 = vsel %vm85, %v203, 0
    %v291 = vsel %vm85, %v278, 0
    %v294 = vsel %vm85, %v279, 0
    %v297 = vsel %vm85, %v280, 0
    %v300 = vsel %vm85, %v281, 0
    %v303 = vsel %vm85, %v282, 0
    %v306 = vsel %vm85, %v283, 0
    %v309 = vsel %vm85, %v284, 0
    %v312 = vsel %vm85, %v285, 0
    %314 = vmatpush.xpose.msra.mxu0 0.0
    %315 = vmatpush.xpose.msra.mxu0 0.0
    %316 = vmatpush.xpose.msra.mxu0 0.0
    %317 = vmatpush.xpose.msra.mxu0 0.0
    %318 = vmatpush.xpose.msra.mxu0 0.0
    %319 = vmatpush.xpose.msra.mxu0 0.0
    %320 = vmatpush.xpose.msra.mxu0 0.0
    %321 = vmatpush.xpose.msra.mxu0 0.0
    %322 = vmatpush.xpose.msra.mxu0 %v312
    %323 = vmatpush.xpose.msra.mxu0 %v309
    %324 = vmatpush.xpose.msra.mxu0 %v306
    %325 = vmatpush.xpose.msra.mxu0 %v303
    %326 = vmatpush.xpose.msra.mxu0 %v300
    %327 = vmatpush.xpose.msra.mxu0 %v297
    %328 = vmatpush.xpose.msra.mxu0 %v294
    %329 = vmatpush.xpose.msra.mxu0 %v291
    %330 = vmatmul.f32.gmra.mxu0 %v286
    %v331 = vpop.f32.mrf.mxu0
    %v332 = vadd.f32 %v41, %v331
    %333 = vmatmul.f32.gmra.mxu0 %v288
    %v334 = vpop.f32.mrf.mxu0
    %v335 = vadd.f32 %v42, %v334
    %336 = vdwg.mxu0
    %vm337 = vcmask 523264
    %v338 = vsel %vm337, %v332, -inf
    %339 = vmax.xlane.f32.xlu0 %v338
    %v340 = vpop.xlane.xlu0 %339
    %v341 = vsel %vm337, %v335, -inf
    %342 = vmax.xlane.f32.xlu0 %v341
    %v343 = vpop.xlane.xlu0 %342
    %v344 = vsub.f32 %v332, %v340
    %v345 = vsub.f32 %v335, %v343
    %v346 = vmul.f32 %v344, 1.442695
    %v347 = vpow.pop %v346
    %v348 = vmul.f32 %v345, 1.442695
    %v349 = vpow.pop %v348
    %v351 = vsel %vm337, %v347, 0
    %v354 = vsel %vm337, %v349, 0
    %356 = vmatpush.msra.mxu0 0.0
    %357 = vmatpush.msra.mxu0 0.0
    %358 = vmatpush.msra.mxu0 0.0
    %359 = vmatpush.msra.mxu0 0.0
    %360 = vmatpush.msra.mxu0 0.0
    %361 = vmatpush.msra.mxu0 0.0
    %362 = vmatpush.msra.mxu0 0.0
    %363 = vmatpush.msra.mxu0 0.0
    %364 = vmatpush.msra.mxu0 %v50
    %365 = vmatpush.msra.mxu0 %v49
    %366 = vmatpush.msra.mxu0 %v48
    %367 = vmatpush.msra.mxu0 %v47
    %368 = vmatpush.msra.mxu0 %v46
    %369 = vmatpush.msra.mxu0 %v45
    %370 = vmatpush.msra.mxu0 %v44
    %371 = vmatpush.msra.mxu0 %v43
    %372 = vmatmul.f32.gmra.mxu0 %v351
    %v373 = vpop.f32.mrf.mxu0
    %v374 = vadd.f32 0.0, %v373
    %375 = vmatmul.f32.gmra.mxu0 %v354
    %v376 = vpop.f32.mrf.mxu0
    %v377 = vadd.f32 0.0, %v376
    %378 = vdwg.mxu0
    %v379 = vrcp.pop %v374
    %v380 = vmul.f32 %v374, %v379
    %v381 = vsub.f32 1.0, %v380
    %v382 = vmul.f32 %v379, %v381
    %v383 = vadd.f32 %v379, %v382
    %vm384 = vweird.f32 %v374
    %vm385 = vweird.f32 %v379
    %vm386 = vmor %vm384, %vm385
    %v387 = vsel %vm386, %v379, %v383
    %v388 = vand.u32 2147483647, %v374
    %vm389 = vcmp.eq.f32.partialorder %v388, 8.507059e+37
    %v390 = vand.u32 %v374, 2147483648
    %v391 = vor.u32 1.1754944e-38, %v390
    %v392 = vsel %vm389, %v391, %v387
    %v393 = vmul.f32 %v347, %v392
    %v394 = vrcp.pop %v377
    %v395 = vmul.f32 %v377, %v394
    %v396 = vsub.f32 1.0, %v395
    %v397 = vmul.f32 %v394, %v396
    %v398 = vadd.f32 %v394, %v397
    %vm399 = vweird.f32 %v377
    %vm400 = vweird.f32 %v394
    %vm401 = vmor %vm399, %vm400
    %v402 = vsel %vm401, %v394, %v398
    %v403 = vand.u32 2147483647, %v377
    %vm404 = vcmp.eq.f32.partialorder %v403, 8.507059e+37
    %v405 = vand.u32 %v377, 2147483648
    %v406 = vor.u32 1.1754944e-38, %v405
    %v407 = vsel %vm404, %v406, %v402
    %v408 = vmul.f32 %v349, %v407
    %409 = vrot.lane.b32.xlu0 %v278, 96
    %v410 = vpop.permute.xlu0 %409
    %411 = vrot.lane.b32.xlu0 %v279, 96
    %v412 = vpop.permute.xlu0 %411
    %413 = vrot.lane.b32.xlu0 %v280, 96
    %v414 = vpop.permute.xlu0 %413
    %415 = vrot.lane.b32.xlu0 %v281, 96
    %v416 = vpop.permute.xlu0 %415
    %417 = vrot.lane.b32.xlu0 %v282, 96
    %v418 = vpop.permute.xlu0 %417
    %419 = vrot.lane.b32.xlu0 %v283, 96
    %v420 = vpop.permute.xlu0 %419
    %421 = vrot.lane.b32.xlu0 %v284, 96
    %v422 = vpop.permute.xlu0 %421
    %423 = vrot.lane.b32.xlu0 %v285, 96
    %v424 = vpop.permute.xlu0 %423
    %v434 = vsel %vm337, %v393, 0
    %v437 = vsel %vm337, %v408, 0
    %439 = vmatpush.msra.mxu0 0.0
    %440 = vmatpush.msra.mxu0 0.0
    %441 = vmatpush.msra.mxu0 0.0
    %442 = vmatpush.msra.mxu0 0.0
    %443 = vmatpush.msra.mxu0 0.0
    %444 = vmatpush.msra.mxu0 0.0
    %445 = vmatpush.msra.mxu0 0.0
    %446 = vmatpush.msra.mxu0 0.0
    %447 = vmatpush.msra.mxu0 %v424
    %448 = vmatpush.msra.mxu0 %v422
    %449 = vmatpush.msra.mxu0 %v420
    %450 = vmatpush.msra.mxu0 %v418
    %451 = vmatpush.msra.mxu0 %v416
    %452 = vmatpush.msra.mxu0 %v414
    %453 = vmatpush.msra.mxu0 %v412
    %454 = vmatpush.msra.mxu0 %v410
    %455 = vmatmul.f32.gmra.mxu0 %v434
    %v456 = vpop.f32.mrf.mxu0
    %v457 = vadd.f32 0.0, %v456
    %458 = vmatmul.f32.gmra.mxu0 %v437
    %v459 = vpop.f32.mrf.mxu0
    %v460 = vadd.f32 0.0, %v459
    %461 = vdwg.mxu0
    %v463 = vsel %vm85, %v457, 0
    %v466 = vsel %vm85, %v460, 0
    %468 = vmatpush.msra.mxu0 0.0
    %469 = vmatpush.msra.mxu0 0.0
    %470 = vmatpush.msra.mxu0 0.0
    %471 = vmatpush.msra.mxu0 0.0
    %472 = vmatpush.msra.mxu0 0.0
    %473 = vmatpush.msra.mxu0 0.0
    %474 = vmatpush.msra.mxu0 0.0
    %475 = vmatpush.msra.mxu0 0.0
    %476 = vmatpush.msra.mxu0 0.0
    %477 = vmatpush.msra.mxu0 0.0
    %478 = vmatpush.msra.mxu0 0.0
    %479 = vmatpush.msra.mxu0 0.0
    %480 = vmatpush.msra.mxu0 %v70
    %481 = vmatpush.msra.mxu0 %v69
    %482 = vmatpush.msra.mxu0 %v68
    %483 = vmatpush.msra.mxu0 %v67
    %484 = vmatmul.f32.gmra.mxu0 %v463
    %v485 = vpop.f32.mrf.mxu0
    %v486 = vadd.f32 0.0, %v485
    %487 = vmatmul.f32.gmra.mxu0 %v466
    %v488 = vpop.f32.mrf.mxu0
    %v489 = vadd.f32 0.0, %v488
    %490 = vdwg.mxu0
    %v491 = vadd.f32 %v27, %v486
    %v492 = vadd.f32 %v28, %v489
    %v493 = vsel %vm85, %v491, 0.0
    %494 = vadd.xlane.f32.xlu0 %v493
    %v495 = vpop.xlane.xlu0 %494
    %v496 = vsel %vm85, %v492, 0.0
    %497 = vadd.xlane.f32.xlu0 %v496
    %v498 = vpop.xlane.xlu0 %497
    %v499 = vmul.f32 %v495, %v98
    %v500 = vmul.f32 %v498, %v98
    %v501 = vsub.f32 %v491, %v499
    %v502 = vsub.f32 %v492, %v500
    %v503 = vmul.f32 %v501, %v501
    %v504 = vmul.f32 %v502, %v502
    %v505 = vsel %vm85, %v503, 0.0
    %506 = vadd.xlane.f32.xlu0 %v505
    %v507 = vpop.xlane.xlu0 %506
    %v508 = vsel %vm85, %v504, 0.0
    %509 = vadd.xlane.f32.xlu0 %v508
    %v510 = vpop.xlane.xlu0 %509
    %v511 = vmul.f32 %v507, %v98
    %v512 = vmul.f32 %v510, %v98
    %v513 = vadd.f32 %v511, 1e-05
    %v514 = vadd.f32 %v512, 1e-05
    %v515 = vrsqrt.pop %v513
    %v516 = vmul.f32 %v515, %v513
    %v517 = vmul.f32 %v516, %v515
    %v518 = vmul.f32 0.5, %v517
    %v519 = vsub.f32 1.5, %v518
    %v520 = vmul.f32 %v515, %v519
    %vm521 = vweird.f32 %v513
    %vm522 = vweird.f32 %v515
    %vm523 = vmor %vm521, %vm522
    %v524 = vsel %vm523, %v515, %v520
    %v525 = vrsqrt.pop %v514
    %v526 = vmul.f32 %v525, %v514
    %v527 = vmul.f32 %v526, %v525
    %v528 = vmul.f32 0.5, %v527
    %v529 = vsub.f32 1.5, %v528
    %v530 = vmul.f32 %v525, %v529
    %vm531 = vweird.f32 %v514
    %vm532 = vweird.f32 %v525
    %vm533 = vmor %vm531, %vm532
    %v534 = vsel %vm533, %v525, %v530
    %v535 = vmul.f32 %v501, %v524
    %v536 = vmul.f32 %v502, %v534
    %537 = vrot.lane.b32.xlu0 %v137, 64
    %v538 = vpop.permute.xlu0 %537
    %v540 = vmul.f32 %v535, %v538
    %v541 = vmul.f32 %v536, %v538
    %542 = vrot.lane.b32.xlu0 %v137, 32
    %v543 = vpop.permute.xlu0 %542
    %v545 = vadd.f32 %v540, %v543
    %v546 = vadd.f32 %v541, %v543
    %v547 = vperm.slane %v84, 0
    %v549 = vsel %vm85, %v545, 0
    %v552 = vsel %vm85, %v546, 0
    %554 = vmatpush.msra.mxu0 0.0
    %555 = vmatpush.msra.mxu0 0.0
    %556 = vmatpush.msra.mxu0 0.0
    %557 = vmatpush.msra.mxu0 0.0
    %558 = vmatpush.msra.mxu0 0.0
    %559 = vmatpush.msra.mxu0 0.0
    %560 = vmatpush.msra.mxu0 0.0
    %561 = vmatpush.msra.mxu0 0.0
    %562 = vmatpush.msra.mxu0 0.0
    %563 = vmatpush.msra.mxu0 0.0
    %564 = vmatpush.msra.mxu0 0.0
    %565 = vmatpush.msra.mxu0 0.0
    %566 = vmatpush.msra.mxu0 %v74
    %567 = vmatpush.msra.mxu0 %v73
    %568 = vmatpush.msra.mxu0 %v72
    %569 = vmatpush.msra.mxu0 %v71
    %570 = vmatmul.f32.gmra.mxu0 %v549
    %v571 = vpop.f32.mrf.mxu0
    %v572 = vadd.f32 %v547, %v571
    %573 = vmatmul.f32.gmra.mxu0 %v552
    %v574 = vpop.f32.mrf.mxu0
    %v575 = vadd.f32 %v547, %v574
    %576 = vdwg.mxu0
    %v577 = vmax.f32 %v572, 0.0
    %v578 = vmax.f32 %v575, 0.0
    %580 = vrot.lane.b32.xlu0 %v547, 64
    %v581 = vpop.permute.xlu0 %580
    %v584 = vsel %vm337, %v577, 0
    %v587 = vsel %vm337, %v578, 0
    %589 = vmatpush.msra.mxu0 0.0
    %590 = vmatpush.msra.mxu0 0.0
    %591 = vmatpush.msra.mxu0 0.0
    %592 = vmatpush.msra.mxu0 0.0
    %593 = vmatpush.msra.mxu0 0.0
    %594 = vmatpush.msra.mxu0 0.0
    %595 = vmatpush.msra.mxu0 0.0
    %596 = vmatpush.msra.mxu0 0.0
    %597 = vmatpush.msra.mxu0 %v82
    %598 = vmatpush.msra.mxu0 %v81
    %599 = vmatpush.msra.mxu0 %v80
    %600 = vmatpush.msra.mxu0 %v79
    %601 = vmatpush.msra.mxu0 %v78
    %602 = vmatpush.msra.mxu0 %v77
    %603 = vmatpush.msra.mxu0 %v76
    %604 = vmatpush.msra.mxu0 %v75
    %605 = vmatmul.f32.gmra.mxu0 %v584
    %v606 = vpop.f32.mrf.mxu0
    %v607 = vadd.f32 %v581, %v606
    %608 = vmatmul.f32.gmra.mxu0 %v587
    %v609 = vpop.f32.mrf.mxu0
    %v610 = vadd.f32 %v581, %v609
    %611 = vdwg.mxu0
    %v612 = vadd.f32 %v491, %v607
    %v613 = vadd.f32 %v492, %v610
    %614 = vst.msk [vmem:[%s2] sm:$0xff] %vm85, %v612
    %615 = vst.msk [vmem:[%s2 + $0x8] sm:$0xff] %vm85, %v613
    // Predicated region
    $region14: #{fwd.1} parent=1 // pred_check
      _
    $region15: #{fwd.1} parent=1 // pred_check_branch
      %617 = sbr.rel (0) target = $region17
    $region16: #{fwd.1} parent=1 // pred_region
      _
    $region17: #{fwd.1} parent=1 // pred_fallthru
      _
    // Predicated region
    $region18: #{fwd.1} parent=1 // pred_check
      _
    $region19: #{fwd.1} parent=1 // pred_check_branch
      %619 = sbr.rel (0) target = $region21
    $region20: #{fwd.1} parent=1 // pred_region
      _
    $region21: #{fwd.1} parent=1 // pred_fallthru
      _
    %620 = vsyncpa [#allocation3], 1

</llo_original>
